<compile_context>
chip_gen: v7x
topology: tpu7x:2x2x1
jax: 0.10.0
libtpu: 0.0.40
codegen_flags: <defaults>
</compile_context>

<pallas_src>
import functools
import math

import jax
import jax.numpy as jnp
from jax.experimental import pallas as pl
from jax.experimental.pallas import tpu as pltpu


_VMEM_LIMIT = 32 * 1024 * 1024  # <= default/physical scoped VMEM on v5e/v6e/v7x


def _round_up(a, m):
    return ((a + m - 1) // m) * m


def _lane_pack_factor(C):
    """Rows folded into the lane axis so the packed width is a multiple of 128
    (lane-dense vld/vst/DMA) and ~512 wide (large DMA descriptors)."""
    w = C * 128 // math.gcd(C, 128)          # lcm(C, 128)
    if w > 1024:
        return 1                             # rare awkward C: masked lanes
    while 2 * w <= 512:
        w *= 2
    return w // C


def _largest_mult8_divisor(n, cap):
    t = (cap // 8) * 8
    while t > 8 and n % t:
        t -= 8
    return max(t, 8)


# --------------------------- small-input fast path ---------------------------
def _fused_small_kernel(x_ref, gamma_ref, beta_ref, o_ref, *, eps):
    x = x_ref[...].astype(jnp.float32)                        # (N, C)
    inv_n = 1.0 / x.shape[0]
    mean = jnp.sum(x, axis=0, keepdims=True) * inv_n          # (1, C)
    xc = x - mean
    var = jnp.sum(xc * xc, axis=0, keepdims=True) * inv_n     # biased (training)
    inv_std = jax.lax.rsqrt(var + eps)                        # EUP slot
    scale = gamma_ref[...] * inv_std
    o_ref[...] = (xc * scale + beta_ref[...]).astype(o_ref.dtype)


# ------------------------------ streaming path -------------------------------
def _stats_kernel(x_ref, sum_ref, sumsq_ref):
    """Per-tile partial per-lane sum / sum(x^2); each tile writes its own
    output block, so the grid axis can be 'parallel' (megacore on v7x)."""
    x = x_ref[...].astype(jnp.float32)                        # (tile_n, CP)
    sum_ref[...] = jnp.sum(x, axis=0, keepdims=True)[None]    # (1, 1, CP)
    sumsq_ref[...] = jnp.sum(x * x, axis=0, keepdims=True)[None]


def _normalize_kernel(x_ref, scale_ref, shift_ref, o_ref):
    """Fused batch-norm apply: y = x * scale + shift (2 VALU ops / element)."""
    x = x_ref[...].astype(jnp.float32)
    o_ref[...] = (x * scale_ref[...] + shift_ref[...]).astype(o_ref.dtype)


def transpose_batchnorm1d(x, gamma, beta, eps=1e-5, max_tile_rows=4096,
                          target_block_bytes=2 * 1024 * 1024,
                          vmem_fast_path_bytes=2 * 1024 * 1024):
    """Equivalent of norm(x.transpose(2,1)).transpose(2,1) with batch stats."""
    B, L, C = x.shape
    N = B * L
    itemsize = x.dtype.itemsize

    # ---- small-input fast path: whole activation resident in VMEM ----------
    if N * C * itemsize <= vmem_fast_path_bytes:
        xf = x.reshape(N, C)
        out = pl.pallas_call(
            functools.partial(_fused_small_kernel, eps=float(eps)),
            out_shape=jax.ShapeDtypeStruct((N, C), x.dtype),
            compiler_params=pltpu.CompilerParams(vmem_limit_bytes=_VMEM_LIMIT),
            cost_estimate=pl.CostEstimate(
                flops=6 * N * C, transcendentals=C,
                bytes_accessed=2 * N * C * itemsize),
        )(xf, gamma.astype(jnp.float32).reshape(1, C),
          beta.astype(jnp.float32).reshape(1, C))
        return out.reshape(B, L, C)

    # ---- streaming path: lane packing + row padding -------------------------
    g = _lane_pack_factor(C)
    CP = g * C
    NP0 = -(-N // g)                              # packed rows (ceil)
    NP = _round_up(NP0, 8)

    # Block-size cap: ~target_block_bytes per (tile_n, CP) block so the
    # double-buffered in+out footprint stays well under scoped VMEM limits
    # on v5e (16 MiB default) / v6e / v7x (32 MiB default, 64 MiB physical).
    cap = min(max_tile_rows, max(8, target_block_bytes // (CP * itemsize)))
    cap = max(8, (cap // 8) * 8)
    if NP <= cap:
        tile_n = NP
    else:
        tile_n = _largest_mult8_divisor(NP, cap)
        if tile_n * 4 < cap:                      # degenerate factorization
            tile_n = cap                          # pad rows up instead of tiny tiles
            NP = _round_up(NP0, cap)
    num_tiles = NP // tile_n
    N_padded = NP * g

    x2 = x.reshape(N, C)
    if N_padded != N:
        # Zero rows contribute nothing to sum / sum(x^2); divide by true N below
        # and slice the padded rows off the output.
        x2 = jnp.pad(x2, ((0, N_padded - N), (0, 0)))
    xf = x2.reshape(NP, CP)                       # row-major relabel

    # ---- Phase 1: per-tile partial sums (parallel over tiles) --------------
    part_sum, part_sumsq = pl.pallas_call(
        _stats_kernel,
        out_shape=(jax.ShapeDtypeStruct((num_tiles, 1, CP), jnp.float32),
                   jax.ShapeDtypeStruct((num_tiles, 1, CP), jnp.float32)),
        grid=(num_tiles,),
        in_specs=[pl.BlockSpec((tile_n, CP), lambda i: (i, 0))],
        out_specs=(pl.BlockSpec((1, 1, CP), lambda i: (i, 0, 0)),
                   pl.BlockSpec((1, 1, CP), lambda i: (i, 0, 0))),
        compiler_params=pltpu.CompilerParams(
            dimension_semantics=("parallel",),
            vmem_limit_bytes=_VMEM_LIMIT),
        cost_estimate=pl.CostEstimate(
            flops=3 * NP * CP, transcendentals=0,
            bytes_accessed=NP * CP * itemsize + 2 * num_tiles * CP * 4),
    )(xf)

    # ---- Tiny O(num_tiles*C) epilogue: fold partials, fused scale/shift ----
    s = part_sum.reshape(-1, C).sum(axis=0)        # (C,)
    sq = part_sumsq.reshape(-1, C).sum(axis=0)     # (C,)
    n_true = float(N)
    mean = s / n_true
    var = jnp.maximum(sq / n_true - mean * mean, 0.0)   # biased var, clamped
    inv_std = jax.lax.rsqrt(var + eps)
    scale = gamma.astype(jnp.float32) * inv_std
    shift = beta.astype(jnp.float32) - mean * scale
    scale_p = jnp.tile(scale, g).reshape(1, CP)
    shift_p = jnp.tile(shift, g).reshape(1, CP)

    # ---- Phase 2: lane-dense fused normalize (parallel over tiles) ---------
    out = pl.pallas_call(
        _normalize_kernel,
        out_shape=jax.ShapeDtypeStruct((NP, CP), x.dtype),
        grid=(num_tiles,),
        in_specs=[pl.BlockSpec((tile_n, CP), lambda i: (i, 0)),
                  pl.BlockSpec((1, CP), lambda i: (0, 0)),
                  pl.BlockSpec((1, CP), lambda i: (0, 0))],
        out_specs=pl.BlockSpec((tile_n, CP), lambda i: (i, 0)),
        compiler_params=pltpu.CompilerParams(
            dimension_semantics=("parallel",),
            vmem_limit_bytes=_VMEM_LIMIT),
        cost_estimate=pl.CostEstimate(
            flops=2 * NP * CP, transcendentals=0,
            bytes_accessed=2 * NP * CP * itemsize),
    )(xf, scale_p, shift_p)

    y = out.reshape(N_padded, C)
    if N_padded != N:
        y = y[:N]
    return y.reshape(B, L, C)


def _reference(x, gamma, beta, eps=1e-5):
    # Pure-JAX reference of training-mode BatchNorm1d over (B, L) per channel.
    xf = x.astype(jnp.float32)
    mean = jnp.mean(xf, axis=(0, 1), keepdims=True)
    var = jnp.mean((xf - mean) ** 2, axis=(0, 1), keepdims=True)
    y = (xf - mean) / jnp.sqrt(var + eps) * gamma + beta
    return y.astype(x.dtype)


if __name__ == "__main__":
    key = jax.random.PRNGKey(0)
    kx, kg, kb, kx2 = jax.random.split(key, 4)

    # nn.BatchNorm1d(in_ch): weight (C,), bias (C,); AKT-style small shapes.
    C = 32
    gamma = jax.random.normal(kg, (C,), dtype=jnp.float32) * 0.1 + 1.0
    beta = jax.random.normal(kb, (C,), dtype=jnp.float32) * 0.1

    # 1) Small-input fused fast path (the actual AKT-scale shape).
    B1, L1 = 2, 64
    x1 = jax.random.normal(kx, (B1, L1, C), dtype=jnp.float32)
    out1 = jax.block_until_ready(transpose_batchnorm1d(x1, gamma, beta))
    ref1 = _reference(x1, gamma, beta)
    assert out1.shape == (B1, L1, C)
    err1 = jnp.max(jnp.abs(out1.astype(jnp.float32) - ref1))
    assert err1 < 1e-4, f"small-path max err {err1}"

    # 2) Streaming two-phase path, forced at a small size (vmem_fast_path_bytes=0,
    #    max_tile_rows=8) so lane packing, zero-row padding, the parallel
    #    partial-sum stats pass and the fused normalize pass are all exercised.
    B2, L2 = 3, 168
    x2 = jax.random.normal(kx2, (B2, L2, C), dtype=jnp.float32)
    out2 = jax.block_until_ready(
        transpose_batchnorm1d(x2, gamma, beta,
                              max_tile_rows=8, vmem_fast_path_bytes=0))
    ref2 = _reference(x2, gamma, beta)
    assert out2.shape == (B2, L2, C)
    err2 = jnp.max(jnp.abs(out2.astype(jnp.float32) - ref2))
    assert err2 < 1e-4, f"streaming-path max err {err2}"

    print("KERNEL_OK")
</pallas_src>

<mosaic_0001>
module attributes {stable_mosaic.version = 11 : i64} {
  func.func @_fused_small_kernel(%arg0: memref<128x32xf32, #tpu.memory_space<vmem>>, %arg1: memref<1x32xf32, #tpu.memory_space<vmem>>, %arg2: memref<1x32xf32, #tpu.memory_space<vmem>>, %arg3: memref<128x32xf32, #tpu.memory_space<vmem>>) attributes {dimension_semantics = [], scalar_prefetch = 0 : i64, scratch_operands = 0 : i64, tpu.core_type = #tpu.core_type<tc>} {
    %c0 = arith.constant 0 : index
    %c0_0 = arith.constant 0 : index
    %0 = vector.load %arg0[%c0, %c0_0] : memref<128x32xf32, #tpu.memory_space<vmem>>, vector<128x32xf32>
    %cst = arith.constant dense<0.000000e+00> : vector<32xf32>
    %1 = vector.multi_reduction <add>, %0, %cst [0] : vector<128x32xf32> to vector<32xf32>
    %2 = vector.shape_cast %1 : vector<32xf32> to vector<1x32xf32>
    %cst_1 = arith.constant 7.812500e-03 : f32
    %3 = vector.broadcast %cst_1 : f32 to vector<1x32xf32>
    %4 = arith.mulf %2, %3 : vector<1x32xf32>
    %5 = vector.broadcast %4 : vector<1x32xf32> to vector<128x32xf32>
    %6 = arith.subf %0, %5 : vector<128x32xf32>
    %7 = arith.mulf %6, %6 : vector<128x32xf32>
    %cst_2 = arith.constant dense<0.000000e+00> : vector<32xf32>
    %8 = vector.multi_reduction <add>, %7, %cst_2 [0] : vector<128x32xf32> to vector<32xf32>
    %9 = vector.shape_cast %8 : vector<32xf32> to vector<1x32xf32>
    %cst_3 = arith.constant 7.812500e-03 : f32
    %10 = vector.broadcast %cst_3 : f32 to vector<1x32xf32>
    %11 = arith.mulf %9, %10 : vector<1x32xf32>
    %cst_4 = arith.constant 9.99999974E-6 : f32
    %12 = vector.broadcast %cst_4 : f32 to vector<1x32xf32>
    %13 = arith.addf %11, %12 : vector<1x32xf32>
    %14 = math.rsqrt %13 : vector<1x32xf32>
    %c0_5 = arith.constant 0 : index
    %c0_6 = arith.constant 0 : index
    %15 = vector.load %arg1[%c0_5, %c0_6] : memref<1x32xf32, #tpu.memory_space<vmem>>, vector<1x32xf32>
    %16 = arith.mulf %15, %14 : vector<1x32xf32>
    %17 = vector.broadcast %16 : vector<1x32xf32> to vector<128x32xf32>
    %18 = arith.mulf %6, %17 : vector<128x32xf32>
    %c0_7 = arith.constant 0 : index
    %c0_8 = arith.constant 0 : index
    %19 = vector.load %arg2[%c0_7, %c0_8] : memref<1x32xf32, #tpu.memory_space<vmem>>, vector<1x32xf32>
    %20 = vector.broadcast %19 : vector<1x32xf32> to vector<128x32xf32>
    %21 = arith.addf %18, %20 : vector<128x32xf32>
    %c0_9 = arith.constant 0 : index
    %c0_10 = arith.constant 0 : index
    %22 = vector.load %arg3[%c0_9, %c0_10] : memref<128x32xf32, #tpu.memory_space<vmem>>, vector<128x32xf32>
    tpu.vector_store %arg3[%c0_9, %c0_10], %21 {strides = array<i32>} : memref<128x32xf32, #tpu.memory_space<vmem>>, vector<128x32xf32>,
    return
  }
}

</mosaic_0001>

<llo_original>
// kernel: tpu_custom_call.1
$region0: #{tpu_custom_call.1}
  #allocation0 [shape = 'u32[]', space=smem, size = 0x4, offset = 0x4, fixed_abs, tag = 'smem constant byte address 0x4 - core index']
  #allocation1 [shape = 'u32[144,128]{1,0:T(1,128)}', space=vmem, size = 0x12000, scoped, tag = 'internal scratch']
  %s0 = inlined_call_operand.vmem [shape: f32[128,32], index: 0, kind: input, shape index: {}]
  %s1 = inlined_call_operand.vmem [shape: f32[1,32], index: 1, kind: input, shape index: {}]
  %s2 = inlined_call_operand.vmem [shape: f32[1,32], index: 2, kind: input, shape index: {}]
  %s3 = inlined_call_operand.vmem [shape: f32[128,32], index: 3, kind: output, shape index: {}]
  %s4 = sld [smem:[#allocation0]]
  $region22: #{tpu_custom_call.1} parent=0
    _
  %s6 = ssub.s32 1, %s4
  %s7 = scalar_select 0, %s6, %s4
  // Predicated region
  $region2: #{tpu_custom_call.1} parent=0 // pred_check
    _
  $region3: #{tpu_custom_call.1} parent=0 // pred_check_branch
    %9 = sbr.rel (0) target = $region5
  $region4: #{tpu_custom_call.1} parent=0 // pred_region
    _
  $region5: #{tpu_custom_call.1} parent=0 // pred_fallthru
    _
  // Predicated region
  $region6: #{tpu_custom_call.1} parent=0 // pred_check
    _
  $region7: #{tpu_custom_call.1} parent=0 // pred_check_branch
    %11 = sbr.rel (0) target = $region9
  $region8: #{tpu_custom_call.1} parent=0 // pred_region
    _
  $region9: #{tpu_custom_call.1} parent=0 // pred_fallthru
    _
  // Predicated region
  $region10: #{tpu_custom_call.1} parent=0 // pred_check
    _
  $region11: #{tpu_custom_call.1} parent=0 // pred_check_branch
    %13 = sbr.rel (0) target = $region13
  $region12: #{tpu_custom_call.1} parent=0 // pred_region
    _
  $region13: #{tpu_custom_call.1} parent=0 // pred_fallthru
    _
  %v14 = vld [vmem:[%s0] sm:$0xff]
  %v15 = vld [vmem:[%s0 + $0x8] sm:$0xff]
  %v16 = vld [vmem:[%s0 + $0x10] sm:$0xff]
  %v17 = vld [vmem:[%s0 + $0x18] sm:$0xff]
  %v18 = vld [vmem:[%s0 + $0x20] sm:$0xff]
  %v19 = vld [vmem:[%s0 + $0x28] sm:$0xff]
  %v20 = vld [vmem:[%s0 + $0x30] sm:$0xff]
  %v21 = vld [vmem:[%s0 + $0x38] sm:$0xff]
  %v22 = vld [vmem:[%s0 + $0x40] sm:$0xff]
  %v23 = vld [vmem:[%s0 + $0x48] sm:$0xff]
  %v24 = vld [vmem:[%s0 + $0x50] sm:$0xff]
  %v25 = vld [vmem:[%s0 + $0x58] sm:$0xff]
  %v26 = vld [vmem:[%s0 + $0x60] sm:$0xff]
  %v27 = vld [vmem:[%s0 + $0x68] sm:$0xff]
  %v28 = vld [vmem:[%s0 + $0x70] sm:$0xff]
  %v29 = vld [vmem:[%s0 + $0x78] sm:$0xff]
  %vm30 = vcmask 261120
  %v31 = vsel %vm30, %v14, 0.0
  %v32 = vsel %vm30, %v15, 0.0
  %v33 = vadd.f32 %v31, %v32
  %v34 = vsel %vm30, %v16, 0.0
  %v35 = vadd.f32 %v33, %v34
  %v36 = vsel %vm30, %v17, 0.0
  %v37 = vadd.f32 %v35, %v36
  %v38 = vsel %vm30, %v18, 0.0
  %v39 = vadd.f32 %v37, %v38
  %v40 = vsel %vm30, %v19, 0.0
  %v41 = vadd.f32 %v39, %v40
  %v42 = vsel %vm30, %v20, 0.0
  %v43 = vadd.f32 %v41, %v42
  %v44 = vsel %vm30, %v21, 0.0
  %v45 = vadd.f32 %v43, %v44
  %v46 = vsel %vm30, %v22, 0.0
  %v47 = vadd.f32 %v45, %v46
  %v48 = vsel %vm30, %v23, 0.0
  %v49 = vadd.f32 %v47, %v48
  %v50 = vsel %vm30, %v24, 0.0
  %v51 = vadd.f32 %v49, %v50
  %v52 = vsel %vm30, %v25, 0.0
  %v53 = vadd.f32 %v51, %v52
  %v54 = vsel %vm30, %v26, 0.0
  %v55 = vadd.f32 %v53, %v54
  %v56 = vsel %vm30, %v27, 0.0
  %v57 = vadd.f32 %v55, %v56
  %v58 = vsel %vm30, %v28, 0.0
  %v59 = vadd.f32 %v57, %v58
  %v60 = vsel %vm30, %v29, 0.0
  %v61 = vadd.f32 %v59, %v60
  %v62 = vrot.slane %v61, 4
  %v63 = vadd.f32 %v61, %v62
  %v64 = vrot.slane %v63, 2
  %v65 = vadd.f32 %v63, %v64
  %v66 = vrot.slane %v65, 1
  %v67 = vadd.f32 %v65, %v66
  %v68 = vmul.f32 %v67, 0.0078125
  %v69 = vsub.f32 %v14, %v68
  %v70 = vsub.f32 %v15, %v68
  %v71 = vsub.f32 %v16, %v68
  %v72 = vsub.f32 %v17, %v68
  %v73 = vsub.f32 %v18, %v68
  %v74 = vsub.f32 %v19, %v68
  %v75 = vsub.f32 %v20, %v68
  %v76 = vsub.f32 %v21, %v68
  %v77 = vsub.f32 %v22, %v68
  %v78 = vsub.f32 %v23, %v68
  %v79 = vsub.f32 %v24, %v68
  %v80 = vsub.f32 %v25, %v68
  %v81 = vsub.f32 %v26, %v68
  %v82 = vsub.f32 %v27, %v68
  %v83 = vsub.f32 %v28, %v68
  %v84 = vsub.f32 %v29, %v68
  %v85 = vmul.f32 %v69, %v69
  %v86 = vmul.f32 %v70, %v70
  %v87 = vmul.f32 %v71, %v71
  %v88 = vmul.f32 %v72, %v72
  %v89 = vmul.f32 %v73, %v73
  %v90 = vmul.f32 %v74, %v74
  %v91 = vmul.f32 %v75, %v75
  %v92 = vmul.f32 %v76, %v76
  %v93 = vmul.f32 %v77, %v77
  %v94 = vmul.f32 %v78, %v78
  %v95 = vmul.f32 %v79, %v79
  %v96 = vmul.f32 %v80, %v80
  %v97 = vmul.f32 %v81, %v81
  %v98 = vmul.f32 %v82, %v82
  %v99 = vmul.f32 %v83, %v83
  %v100 = vmul.f32 %v84, %v84
  %v101 = vsel %vm30, %v85, 0.0
  %v102 = vsel %vm30, %v86, 0.0
  %v103 = vadd.f32 %v101, %v102
  %v104 = vsel %vm30, %v87, 0.0
  %v105 = vadd.f32 %v103, %v104
  %v106 = vsel %vm30, %v88, 0.0
  %v107 = vadd.f32 %v105, %v106
  %v108 = vsel %vm30, %v89, 0.0
  %v109 = vadd.f32 %v107, %v108
  %v110 = vsel %vm30, %v90, 0.0
  %v111 = vadd.f32 %v109, %v110
  %v112 = vsel %vm30, %v91, 0.0
  %v113 = vadd.f32 %v111, %v112
  %v114 = vsel %vm30, %v92, 0.0
  %v115 = vadd.f32 %v113, %v114
  %v116 = vsel %vm30, %v93, 0.0
  %v117 = vadd.f32 %v115, %v116
  %v118 = vsel %vm30, %v94, 0.0
  %v119 = vadd.f32 %v117, %v118
  %v120 = vsel %vm30, %v95, 0.0
  %v121 = vadd.f32 %v119, %v120
  %v122 = vsel %vm30, %v96, 0.0
  %v123 = vadd.f32 %v121, %v122
  %v124 = vsel %vm30, %v97, 0.0
  %v125 = vadd.f32 %v123, %v124
  %v126 = vsel %vm30, %v98, 0.0
  %v127 = vadd.f32 %v125, %v126
  %v128 = vsel %vm30, %v99, 0.0
  %v129 = vadd.f32 %v127, %v128
  %v130 = vsel %vm30, %v100, 0.0
  %v131 = vadd.f32 %v129, %v130
  %v132 = vrot.slane %v131, 4
  %v133 = vadd.f32 %v131, %v132
  %v134 = vrot.slane %v133, 2
  %v135 = vadd.f32 %v133, %v134
  %v136 = vrot.slane %v135, 1
  %v137 = vadd.f32 %v135, %v136
  %v138 = vmul.f32 %v137, 0.0078125
  %v139 = vadd.f32 %v138, 1e-05
  %v140 = vrsqrt.pop %v139
  %v141 = vld [vmem:[%s1] sm:$0x1]
  %v142 = vmul.f32 %v141, %v140
  %v144 = vlaneseq
  %v145 = vshrl.u32 %v144, 7
  %v146 = vsub.s32 0, %v145
  %v147 = vrot.slane %v142, %v146
  %v149 = vmul.f32 %v69, %v147
  %v150 = vmul.f32 %v70, %v147
  %v151 = vmul.f32 %v71, %v147
  %v152 = vmul.f32 %v72, %v147
  %v153 = vmul.f32 %v73, %v147
  %v154 = vmul.f32 %v74, %v147
  %v155 = vmul.f32 %v75, %v147
  %v156 = vmul.f32 %v76, %v147
  %v157 = vmul.f32 %v77, %v147
  %v158 = vmul.f32 %v78, %v147
  %v159 = vmul.f32 %v79, %v147
  %v160 = vmul.f32 %v80, %v147
  %v161 = vmul.f32 %v81, %v147
  %v162 = vmul.f32 %v82, %v147
  %v163 = vmul.f32 %v83, %v147
  %v164 = vmul.f32 %v84, %v147
  %v165 = vld [vmem:[%s2] sm:$0x1]
  %v167 = vlaneseq
  %v168 = vshrl.u32 %v167, 7
  %v169 = vsub.s32 0, %v168
  %v170 = vrot.slane %v165, %v169
  %v172 = vadd.f32 %v149, %v170
  %v173 = vadd.f32 %v150, %v170
  %v174 = vadd.f32 %v151, %v170
  %v175 = vadd.f32 %v152, %v170
  %v176 = vadd.f32 %v153, %v170
  %v177 = vadd.f32 %v154, %v170
  %v178 = vadd.f32 %v155, %v170
  %v179 = vadd.f32 %v156, %v170
  %v180 = vadd.f32 %v157, %v170
  %v181 = vadd.f32 %v158, %v170
  %v182 = vadd.f32 %v159, %v170
  %v183 = vadd.f32 %v160, %v170
  %v184 = vadd.f32 %v161, %v170
  %v185 = vadd.f32 %v162, %v170
  %v186 = vadd.f32 %v163, %v170
  %v187 = vadd.f32 %v164, %v170
  %188 = vst.msk [vmem:[%s3] sm:$0xff] %vm30, %v172
  %189 = vst.msk [vmem:[%s3 + $0x8] sm:$0xff] %vm30, %v173
  %190 = vst.msk [vmem:[%s3 + $0x10] sm:$0xff] %vm30, %v174
  %191 = vst.msk [vmem:[%s3 + $0x18] sm:$0xff] %vm30, %v175
  %192 = vst.msk [vmem:[%s3 + $0x20] sm:$0xff] %vm30, %v176
  %193 = vst.msk [vmem:[%s3 + $0x28] sm:$0xff] %vm30, %v177
  %194 = vst.msk [vmem:[%s3 + $0x30] sm:$0xff] %vm30, %v178
  %195 = vst.msk [vmem:[%s3 + $0x38] sm:$0xff] %vm30, %v179
  %196 = vst.msk [vmem:[%s3 + $0x40] sm:$0xff] %vm30, %v180
  %197 = vst.msk [vmem:[%s3 + $0x48] sm:$0xff] %vm30, %v181
  %198 = vst.msk [vmem:[%s3 + $0x50] sm:$0xff] %vm30, %v182
  %199 = vst.msk [vmem:[%s3 + $0x58] sm:$0xff] %vm30, %v183
  %200 = vst.msk [vmem:[%s3 + $0x60] sm:$0xff] %vm30, %v184
  %201 = vst.msk [vmem:[%s3 + $0x68] sm:$0xff] %vm30, %v185
  %202 = vst.msk [vmem:[%s3 + $0x70] sm:$0xff] %vm30, %v186
  %203 = vst.msk [vmem:[%s3 + $0x78] sm:$0xff] %vm30, %v187
  // Predicated region
  $region14: #{tpu_custom_call.1} parent=0 // pred_check
    _
  $region15: #{tpu_custom_call.1} parent=0 // pred_check_branch
    %205 = sbr.rel (0) target = $region17
  $region16: #{tpu_custom_call.1} parent=0 // pred_region
    _
  $region17: #{tpu_custom_call.1} parent=0 // pred_fallthru
    _
  // Predicated region
  $region18: #{tpu_custom_call.1} parent=0 // pred_check
    _
  $region19: #{tpu_custom_call.1} parent=0 // pred_check_branch
    %207 = sbr.rel (0) target = $region21
  $region20: #{tpu_custom_call.1} parent=0 // pred_region
    _
  $region21: #{tpu_custom_call.1} parent=0 // pred_fallthru
    _

</llo_original>
